<compile_context>
chip_gen: v7x
topology: tpu7x:2x2x1
jax: 0.10.0
libtpu: 0.0.40
codegen_flags: <defaults>
</compile_context>

<pallas_src>
import functools
import math

import numpy as np

import jax
import jax.numpy as jnp
from jax import lax
from jax.experimental import pallas as pl
from jax.experimental.pallas import tpu as pltpu


# ----------------------------- Pallas kernel --------------------------------
def multicell_lstm_kernel(ig_ref,               # VMEM (Tc, B, 4H) pre-scaled input gates (+bias)
                          whh_ref,              # VMEM (3, H, 4H) pre-scaled dedup recurrent weights
                          gmul_ref, gadd_ref,   # VMEM (1, 4H) per-lane gate affine
                          h_out_ref,            # VMEM (B, H) output; carries h across chunks
                          c_scr,                # VMEM (B, H) persistent cell state
                          *, hidden, chunk, period, period_cells,
                          hoist_weights, unroll):
    H = hidden
    B = h_out_ref.shape[0]
    ct = pl.program_id(0)

    @pl.when(ct == 0)
    def _init():
        h_out_ref[...] = jnp.zeros_like(h_out_ref)
        c_scr[...] = jnp.zeros_like(c_scr)

    # Hoisted loop-invariant per-lane affine: act = tanh(gates) * gmul + gadd
    #   i/f/o lanes: 0.5*tanh(.) + 0.5  (== sigmoid, pre-scale baked into weights)
    #   g lanes    : 1.0*tanh(.) + 0.0
    gmul = jnp.broadcast_to(gmul_ref[...], (B, 4 * H))
    gadd = jnp.broadcast_to(gadd_ref[...], (B, 4 * H))

    if hoist_weights:
        whh = tuple(whh_ref[i] for i in range(whh_ref.shape[0]))  # vreg-resident

    w_dtype = whh_ref.dtype

    def one_step(cell, ig, h, c):
        w = whh[cell] if hoist_weights else whh_ref[cell]          # static index
        gates = ig + jnp.dot(h.astype(w_dtype), w,
                             preferred_element_type=jnp.float32)
        act = jnp.tanh(gates) * gmul + gadd        # single full-width EUP pass
        i = act[:, 0 * H:1 * H]
        f = act[:, 1 * H:2 * H]
        g = act[:, 2 * H:3 * H]
        o = act[:, 3 * H:4 * H]
        c_new = f * c + i * g
        h_new = o * jnp.tanh(c_new)
        return h_new, c_new

    n_periods = chunk // period

    def period_body(p, carry):
        h, c = carry
        base = p * period
        for s, cell in enumerate(period_cells):    # static unroll, static cell
            h, c = one_step(cell, ig_ref[base + s], h, c)
        return h, c

    h, c = lax.fori_loop(0, n_periods, period_body,
                         (h_out_ref[...], c_scr[...]), unroll=unroll)
    h_out_ref[...] = h
    c_scr[...] = c


# ----------------------------- JAX glue --------------------------------------
def _choose_chunk(T1, period, B, H, bytes_per, vmem_budget_bytes):
    # chunk must be a multiple of the schedule period and divide T1.
    # The streamed input-gate block is double-buffered by the Pallas pipeline.
    max_by_vmem = max(period, vmem_budget_bytes // (2 * B * 4 * H * bytes_per))
    best = period
    for c in range(period, T1 + 1, period):
        if T1 % c == 0 and c <= max_by_vmem:
            best = c
    return best


def multicell_lstm_forward(x1, x2, x3, params, hidden, output_size, *,
                           mxu_dtype=jnp.float32,
                           vmem_budget_bytes=8 * 1024 * 1024):
    B, T1 = x1.shape
    _, T2 = x2.shape
    _, T3 = x3.shape
    assert T1 % T2 == 0 and T1 % T3 == 0, "T1 must be an exact multiple of T2/T3"
    ratio2, ratio3 = T1 // T2, T1 // T3
    H = hidden

    # ---- compile-time-static per-step schedule (trace-time numpy) ----
    t_idx = np.arange(T1)
    use2 = (t_idx % ratio2) == 0
    use3 = (t_idx % ratio3) == 0
    # step type: 0 = x1 only, 1 = x1+x2, 2 = x1+x3, 3 = x1+x2+x3
    step_type = use2.astype(np.int32) + 2 * use3.astype(np.int32)
    cell_of_type = np.array([0, 1, 1, 2], np.int32)       # index into W_hh stack
    cells = cell_of_type[step_type]                       # (T1,)
    period = math.lcm(ratio2, ratio3)                     # schedule period
    assert T1 % period == 0
    assert np.all(cells.reshape(-1, period) == cells[:period])
    period_cells = tuple(int(c) for c in cells[:period])  # static Python tuple

    # ---- tanh-identity gate affine: sigmoid(x) = 0.5 + 0.5*tanh(0.5*x) ----
    lane = np.arange(4 * H)
    is_g = (lane >= 2 * H) & (lane < 3 * H)
    pre_scale = np.where(is_g, 1.0, 0.5).astype(np.float32)   # baked into W_hh / ig
    gate_mul = jnp.asarray(np.where(is_g, 1.0, 0.5), jnp.float32)[None, :]
    gate_add = jnp.asarray(np.where(is_g, 0.0, 0.5), jnp.float32)[None, :]

    # ---- time-major packed inputs (off-schedule features are exact zeros) ----
    f2 = jnp.where(use2[:, None], x2.T[np.minimum(t_idx // ratio2, T2 - 1)], 0.0)
    f3 = jnp.where(use3[:, None], x3.T[np.minimum(t_idx // ratio3, T3 - 1)], 0.0)
    x_full = jnp.stack([x1.T, f2, f3], axis=-1)               # (T1, B, 3)

    # ---- dedup effective input-weight / bias tables, one row per step type ----
    z = jnp.zeros((4 * H,), jnp.float32)
    w1T, w2T, w3T = params["w_ih1"].T, params["w_ih2"].T, params["w_ih3"].T
    wih_table = jnp.stack([
        jnp.stack([w1T[0], z, z]),                 # x1          -> cell1
        jnp.stack([w2T[0], w2T[1], z]),            # x1,x2       -> cell2
        jnp.stack([w2T[0], z, w2T[1]]),            # x1,x3       -> cell2
        jnp.stack([w3T[0], w3T[1], w3T[2]]),       # x1,x2,x3    -> cell3
    ])                                             # (4, 3, 4H)
    bias_table = jnp.stack([
        params["b_ih1"] + params["b_hh1"],
        params["b_ih2"] + params["b_hh2"],
        params["b_ih2"] + params["b_hh2"],
        params["b_ih3"] + params["b_hh3"],
    ])                                             # (4, 4H)

    # ---- hoisted input projection (+bias): one batched matmul outside loop ----
    step_type_j = jnp.asarray(step_type)
    input_gates = jnp.einsum("tbf,tfg->tbg", x_full, wih_table[step_type_j])
    input_gates = input_gates + bias_table[step_type_j][:, None, :]
    input_gates = (input_gates * pre_scale).astype(mxu_dtype)     # (T1, B, 4H)

    # ---- deduplicated, pre-scaled recurrent weights ----
    whh_all = (jnp.stack([params["w_hh1"].T, params["w_hh2"].T,
                          params["w_hh3"].T]) * pre_scale).astype(mxu_dtype)

    bytes_per = jnp.dtype(mxu_dtype).itemsize
    chunk = _choose_chunk(T1, period, B, H, bytes_per, vmem_budget_bytes)
    nchunks = T1 // chunk
    n_periods = chunk // period
    unroll = True if n_periods <= 8 else 8
    hoist_weights = H <= 64      # 3 x (H,4H) tiles fit the vreg budget

    kernel = functools.partial(
        multicell_lstm_kernel, hidden=H, chunk=chunk, period=period,
        period_cells=period_cells, hoist_weights=hoist_weights, unroll=unroll)

    grid_spec = pltpu.PrefetchScalarGridSpec(
        num_scalar_prefetch=0,
        grid=(nchunks,),
        in_specs=[
            pl.BlockSpec((chunk, B, 4 * H), lambda ct: (ct, 0, 0)),
            pl.BlockSpec((3, H, 4 * H), lambda ct: (0, 0, 0)),
            pl.BlockSpec((1, 4 * H), lambda ct: (0, 0)),
            pl.BlockSpec((1, 4 * H), lambda ct: (0, 0)),
        ],
        out_specs=pl.BlockSpec((B, H), lambda ct: (0, 0)),
        scratch_shapes=[pltpu.VMEM((B, H), jnp.float32)],
    )

    h_last = pl.pallas_call(
        kernel,
        out_shape=jax.ShapeDtypeStruct((B, H), jnp.float32),
        grid_spec=grid_spec,
        compiler_params=pltpu.CompilerParams(
            dimension_semantics=("arbitrary",)),
    )(input_gates, whh_all, gate_mul, gate_add)

    # Output head (Linear + Sigmoid) in JAX glue per perf review: a (B,1) output
    # inside the kernel is a 1-lane masked store + warm-up-only MXU call.
    return jax.nn.sigmoid(h_last @ params["w_out"].T + params["b_out"])


# ----------------------------- pure-JAX reference ----------------------------
def multicell_lstm_reference(x1, x2, x3, params, hidden, output_size):
    B, T1 = x1.shape
    _, T2 = x2.shape
    _, T3 = x3.shape
    ratio2, ratio3 = T1 // T2, T1 // T3
    H = hidden
    hx = jnp.zeros((B, H), jnp.float32)
    cx = jnp.zeros((B, H), jnp.float32)
    for t in range(T1):
        cols = [x1[:, t][:, None]]
        if t % ratio2 == 0:
            cols.append(x2[:, t // ratio2][:, None])
        if t % ratio3 == 0:
            cols.append(x3[:, t // ratio3][:, None])
        x_in = jnp.concatenate(cols, axis=1)
        cell = x_in.shape[1]           # shape-based dispatch, same as PyTorch
        gates = (x_in @ params[f"w_ih{cell}"].T + hx @ params[f"w_hh{cell}"].T
                 + params[f"b_ih{cell}"] + params[f"b_hh{cell}"])
        i = jax.nn.sigmoid(gates[:, 0 * H:1 * H])
        f = jax.nn.sigmoid(gates[:, 1 * H:2 * H])
        g = jnp.tanh(gates[:, 2 * H:3 * H])
        o = jax.nn.sigmoid(gates[:, 3 * H:4 * H])
        cx = f * cx + i * g
        hx = o * jnp.tanh(cx)
    return jax.nn.sigmoid(hx @ params["w_out"].T + params["b_out"])


# ----------------------------- main -------------------------------------------
if __name__ == "__main__":
    B, T1, T2, T3 = 8, 8, 4, 2
    HIDDEN, OUT = 32, 1

    key = jax.random.PRNGKey(0)
    ks = jax.random.split(key, 17)
    bound = 1.0 / jnp.sqrt(jnp.float32(HIDDEN))

    def u(k, shape):
        return jax.random.uniform(k, shape, jnp.float32, -bound, bound)

    params = {
        "w_ih3": u(ks[0], (4 * HIDDEN, 3)), "w_hh3": u(ks[1], (4 * HIDDEN, HIDDEN)),
        "b_ih3": u(ks[2], (4 * HIDDEN,)),   "b_hh3": u(ks[3], (4 * HIDDEN,)),
        "w_ih2": u(ks[4], (4 * HIDDEN, 2)), "w_hh2": u(ks[5], (4 * HIDDEN, HIDDEN)),
        "b_ih2": u(ks[6], (4 * HIDDEN,)),   "b_hh2": u(ks[7], (4 * HIDDEN,)),
        "w_ih1": u(ks[8], (4 * HIDDEN, 1)), "w_hh1": u(ks[9], (4 * HIDDEN, HIDDEN)),
        "b_ih1": u(ks[10], (4 * HIDDEN,)),  "b_hh1": u(ks[11], (4 * HIDDEN,)),
        "w_out": u(ks[12], (OUT, HIDDEN)),  "b_out": u(ks[13], (OUT,)),
    }

    x1 = jax.random.normal(ks[14], (B, T1), jnp.float32)
    x2 = jax.random.normal(ks[15], (B, T2), jnp.float32)
    x3 = jax.random.normal(ks[16], (B, T3), jnp.float32)

    out = multicell_lstm_forward(x1, x2, x3, params, HIDDEN, OUT)
    out = jax.block_until_ready(out)

    ref = multicell_lstm_reference(x1, x2, x3, params, HIDDEN, OUT)
    assert out.shape == (B, OUT)
    # Tolerance 1e-4: FP association differs slightly (hoisted projection,
    # tanh-identity sigmoid, pre-scaled weights); do not tighten.
    assert jnp.allclose(out, ref, atol=1e-4, rtol=1e-4), (
        f"max abs diff = {jnp.max(jnp.abs(out - ref))}")

    print("KERNEL_OK")
</pallas_src>

<mosaic_0001>
module attributes {stable_mosaic.version = 11 : i64} {
  func.func @multicell_lstm_kernel(%arg0: i32, %arg1: memref<8x8x128xf32, #tpu.memory_space<vmem>>, %arg2: memref<3x32x128xf32, #tpu.memory_space<vmem>>, %arg3: memref<1x128xf32, #tpu.memory_space<vmem>>, %arg4: memref<1x128xf32, #tpu.memory_space<vmem>>, %arg5: memref<8x32xf32, #tpu.memory_space<vmem>>, %arg6: memref<8x32xf32, #tpu.memory_space<vmem>>) attributes {dimension_semantics = [#tpu.dimension_semantics<arbitrary>], iteration_bounds = array<i64: 1>, scalar_prefetch = 0 : i64, scratch_operands = 1 : i64, tpu.core_type = #tpu.core_type<tc>, window_params = [{transform_indices = @transform_0, window_bounds = array<i64: 8, 8, 128>}, {pipeline_mode = #tpu.pipeline_mode<synchronous>, transform_indices = @transform_1, window_bounds = array<i64: 3, 32, 128>}, {pipeline_mode = #tpu.pipeline_mode<synchronous>, transform_indices = @transform_2, window_bounds = array<i64: 1, 128>}, {pipeline_mode = #tpu.pipeline_mode<synchronous>, transform_indices = @transform_3, window_bounds = array<i64: 1, 128>}, {pipeline_mode = #tpu.pipeline_mode<synchronous>, transform_indices = @transform_4, window_bounds = array<i64: 8, 32>}]} {
    %c0_i32 = arith.constant 0 : i32
    %0 = arith.cmpi eq, %arg0, %c0_i32 : i32
    %1 = arith.extui %0 : i1 to i32
    %c0_i32_0 = arith.constant 0 : i32
    %2 = arith.cmpi ne, %1, %c0_i32_0 : i32
    scf.if %2 {
      %cst_51 = arith.constant 0.000000e+00 : f32
      %165 = vector.broadcast %cst_51 : f32 to vector<8x32xf32>
      %c0_52 = arith.constant 0 : index
      %c0_53 = arith.constant 0 : index
      %166 = vector.load %arg5[%c0_52, %c0_53] : memref<8x32xf32, #tpu.memory_space<vmem>>, vector<8x32xf32>
      tpu.vector_store %arg5[%c0_52, %c0_53], %165 {strides = array<i32>} : memref<8x32xf32, #tpu.memory_space<vmem>>, vector<8x32xf32>,
      %cst_54 = arith.constant 0.000000e+00 : f32
      %167 = vector.broadcast %cst_54 : f32 to vector<8x32xf32>
      %c0_55 = arith.constant 0 : index
      %c0_56 = arith.constant 0 : index
      %168 = vector.load %arg6[%c0_55, %c0_56] : memref<8x32xf32, #tpu.memory_space<vmem>>, vector<8x32xf32>
      tpu.vector_store %arg6[%c0_55, %c0_56], %167 {strides = array<i32>} : memref<8x32xf32, #tpu.memory_space<vmem>>, vector<8x32xf32>,
    } else {
    }
    %c0 = arith.constant 0 : index
    %c0_1 = arith.constant 0 : index
    %3 = vector.load %arg3[%c0, %c0_1] : memref<1x128xf32, #tpu.memory_space<vmem>>, vector<1x128xf32>
    %4 = vector.shape_cast %3 : vector<1x128xf32> to vector<1x128xf32>
    %5 = vector.broadcast %4 : vector<1x128xf32> to vector<8x128xf32>
    %c0_2 = arith.constant 0 : index
    %c0_3 = arith.constant 0 : index
    %6 = vector.load %arg4[%c0_2, %c0_3] : memref<1x128xf32, #tpu.memory_space<vmem>>, vector<1x128xf32>
    %7 = vector.shape_cast %6 : vector<1x128xf32> to vector<1x128xf32>
    %8 = vector.broadcast %7 : vector<1x128xf32> to vector<8x128xf32>
    %c0_4 = arith.constant 0 : index
    %c0_5 = arith.constant 0 : index
    %c0_6 = arith.constant 0 : index
    %9 = vector.load %arg2[%c0_4, %c0_5, %c0_6] : memref<3x32x128xf32, #tpu.memory_space<vmem>>, vector<1x32x128xf32>
    %10 = vector.shape_cast %9 : vector<1x32x128xf32> to vector<32x128xf32>
    %c1 = arith.constant 1 : index
    %c0_7 = arith.constant 0 : index
    %c0_8 = arith.constant 0 : index
    %11 = vector.load %arg2[%c1, %c0_7, %c0_8] : memref<3x32x128xf32, #tpu.memory_space<vmem>>, vector<1x32x128xf32>
    %12 = vector.shape_cast %11 : vector<1x32x128xf32> to vector<32x128xf32>
    %c2 = arith.constant 2 : index
    %c0_9 = arith.constant 0 : index
    %c0_10 = arith.constant 0 : index
    %13 = vector.load %arg2[%c2, %c0_9, %c0_10] : memref<3x32x128xf32, #tpu.memory_space<vmem>>, vector<1x32x128xf32>
    %14 = vector.shape_cast %13 : vector<1x32x128xf32> to vector<32x128xf32>
    %c0_11 = arith.constant 0 : index
    %c0_12 = arith.constant 0 : index
    %15 = vector.load %arg5[%c0_11, %c0_12] : memref<8x32xf32, #tpu.memory_space<vmem>>, vector<8x32xf32>
    %c0_13 = arith.constant 0 : index
    %c0_14 = arith.constant 0 : index
    %16 = vector.load %arg6[%c0_13, %c0_14] : memref<8x32xf32, #tpu.memory_space<vmem>>, vector<8x32xf32>
    %c0_i32_15 = arith.constant 0 : i32
    %c4_i32 = arith.constant 4 : i32
    %17 = arith.muli %c0_i32_15, %c4_i32 : i32
    %c0_i32_16 = arith.constant 0 : i32
    %18 = arith.addi %17, %c0_i32_16 : i32
    %19 = arith.index_cast %18 : i32 to index
    %c0_17 = arith.constant 0 : index
    %c0_18 = arith.constant 0 : index
    %20 = vector.load %arg1[%19, %c0_17, %c0_18] : memref<8x8x128xf32, #tpu.memory_space<vmem>>, vector<1x8x128xf32>
    %21 = vector.shape_cast %20 : vector<1x8x128xf32> to vector<8x128xf32>
    %cst = arith.constant dense<0.000000e+00> : vector<8x128xf32>
    %22 = tpu.matmul %15, %14, %cst {dimension_numbers = #tpu.dot_dimension_numbers<[1], [0], [0], [1], [0, 0, 1, 1], [], []>} : vector<8x32xf32>, vector<32x128xf32>, vector<8x128xf32> -> vector<8x128xf32>
    %23 = arith.addf %21, %22 : vector<8x128xf32>
    %24 = math.tanh %23 : vector<8x128xf32>
    %25 = arith.mulf %24, %5 : vector<8x128xf32>
    %26 = arith.addf %25, %8 : vector<8x128xf32>
    %27 = vector.extract_strided_slice %26 {offsets = [0, 0], sizes = [8, 32], strides = [1, 1]} : vector<8x128xf32> to vector<8x32xf32>
    %28 = vector.extract_strided_slice %26 {offsets = [0, 32], sizes = [8, 32], strides = [1, 1]} : vector<8x128xf32> to vector<8x32xf32>
    %29 = vector.extract_strided_slice %26 {offsets = [0, 64], sizes = [8, 32], strides = [1, 1]} : vector<8x128xf32> to vector<8x32xf32>
    %30 = vector.extract_strided_slice %26 {offsets = [0, 96], sizes = [8, 32], strides = [1, 1]} : vector<8x128xf32> to vector<8x32xf32>
    %31 = arith.mulf %28, %16 : vector<8x32xf32>
    %32 = arith.mulf %27, %29 : vector<8x32xf32>
    %33 = arith.addf %31, %32 : vector<8x32xf32>
    %34 = math.tanh %33 : vector<8x32xf32>
    %35 = arith.mulf %30, %34 : vector<8x32xf32>
    %c1_i32 = arith.constant 1 : i32
    %36 = arith.addi %17, %c1_i32 : i32
    %37 = arith.index_cast %36 : i32 to index
    %c0_19 = arith.constant 0 : index
    %c0_20 = arith.constant 0 : index
    %38 = vector.load %arg1[%37, %c0_19, %c0_20] : memref<8x8x128xf32, #tpu.memory_space<vmem>>, vector<1x8x128xf32>
    %39 = vector.shape_cast %38 : vector<1x8x128xf32> to vector<8x128xf32>
    %cst_21 = arith.constant dense<0.000000e+00> : vector<8x128xf32>
    %40 = tpu.matmul %35, %10, %cst_21 {dimension_numbers = #tpu.dot_dimension_numbers<[1], [0], [0], [1], [0, 0, 1, 1], [], []>} : vector<8x32xf32>, vector<32x128xf32>, vector<8x128xf32> -> vector<8x128xf32>
    %41 = arith.addf %39, %40 : vector<8x128xf32>
    %42 = math.tanh %41 : vector<8x128xf32>
    %43 = arith.mulf %42, %5 : vector<8x128xf32>
    %44 = arith.addf %43, %8 : vector<8x128xf32>
    %45 = vector.extract_strided_slice %44 {offsets = [0, 0], sizes = [8, 32], strides = [1, 1]} : vector<8x128xf32> to vector<8x32xf32>
    %46 = vector.extract_strided_slice %44 {offsets = [0, 32], sizes = [8, 32], strides = [1, 1]} : vector<8x128xf32> to vector<8x32xf32>
    %47 = vector.extract_strided_slice %44 {offsets = [0, 64], sizes = [8, 32], strides = [1, 1]} : vector<8x128xf32> to vector<8x32xf32>
    %48 = vector.extract_strided_slice %44 {offsets = [0, 96], sizes = [8, 32], strides = [1, 1]} : vector<8x128xf32> to vector<8x32xf32>
    %49 = arith.mulf %46, %33 : vector<8x32xf32>
    %50 = arith.mulf %45, %47 : vector<8x32xf32>
    %51 = arith.addf %49, %50 : vector<8x32xf32>
    %52 = math.tanh %51 : vector<8x32xf32>
    %53 = arith.mulf %48, %52 : vector<8x32xf32>
    %c2_i32 = arith.constant 2 : i32
    %54 = arith.addi %17, %c2_i32 : i32
    %55 = arith.index_cast %54 : i32 to index
    %c0_22 = arith.constant 0 : index
    %c0_23 = arith.constant 0 : index
    %56 = vector.load %arg1[%55, %c0_22, %c0_23] : memref<8x8x128xf32, #tpu.memory_space<vmem>>, vector<1x8x128xf32>
    %57 = vector.shape_cast %56 : vector<1x8x128xf32> to vector<8x128xf32>
    %cst_24 = arith.constant dense<0.000000e+00> : vector<8x128xf32>
    %58 = tpu.matmul %53, %12, %cst_24 {dimension_numbers = #tpu.dot_dimension_numbers<[1], [0], [0], [1], [0, 0, 1, 1], [], []>} : vector<8x32xf32>, vector<32x128xf32>, vector<8x128xf32> -> vector<8x128xf32>
    %59 = arith.addf %57, %58 : vector<8x128xf32>
    %60 = math.tanh %59 : vector<8x128xf32>
    %61 = arith.mulf %60, %5 : vector<8x128xf32>
    %62 = arith.addf %61, %8 : vector<8x128xf32>
    %63 = vector.extract_strided_slice %62 {offsets = [0, 0], sizes = [8, 32], strides = [1, 1]} : vector<8x128xf32> to vector<8x32xf32>
    %64 = vector.extract_strided_slice %62 {offsets = [0, 32], sizes = [8, 32], strides = [1, 1]} : vector<8x128xf32> to vector<8x32xf32>
    %65 = vector.extract_strided_slice %62 {offsets = [0, 64], sizes = [8, 32], strides = [1, 1]} : vector<8x128xf32> to vector<8x32xf32>
    %66 = vector.extract_strided_slice %62 {offsets = [0, 96], sizes = [8, 32], strides = [1, 1]} : vector<8x128xf32> to vector<8x32xf32>
    %67 = arith.mulf %64, %51 : vector<8x32xf32>
    %68 = arith.mulf %63, %65 : vector<8x32xf32>
    %69 = arith.addf %67, %68 : vector<8x32xf32>
    %70 = math.tanh %69 : vector<8x32xf32>
    %71 = arith.mulf %66, %70 : vector<8x32xf32>
    %c3_i32 = arith.constant 3 : i32
    %72 = arith.addi %17, %c3_i32 : i32
    %73 = arith.index_cast %72 : i32 to index
    %c0_25 = arith.constant 0 : index
    %c0_26 = arith.constant 0 : index
    %74 = vector.load %arg1[%73, %c0_25, %c0_26] : memref<8x8x128xf32, #tpu.memory_space<vmem>>, vector<1x8x128xf32>
    %75 = vector.shape_cast %74 : vector<1x8x128xf32> to vector<8x128xf32>
    %cst_27 = arith.constant dense<0.000000e+00> : vector<8x128xf32>
    %76 = tpu.matmul %71, %10, %cst_27 {dimension_numbers = #tpu.dot_dimension_numbers<[1], [0], [0], [1], [0, 0, 1, 1], [], []>} : vector<8x32xf32>, vector<32x128xf32>, vector<8x128xf32> -> vector<8x128xf32>
    %77 = arith.addf %75, %76 : vector<8x128xf32>
    %78 = math.tanh %77 : vector<8x128xf32>
    %79 = arith.mulf %78, %5 : vector<8x128xf32>
    %80 = arith.addf %79, %8 : vector<8x128xf32>
    %81 = vector.extract_strided_slice %80 {offsets = [0, 0], sizes = [8, 32], strides = [1, 1]} : vector<8x128xf32> to vector<8x32xf32>
    %82 = vector.extract_strided_slice %80 {offsets = [0, 32], sizes = [8, 32], strides = [1, 1]} : vector<8x128xf32> to vector<8x32xf32>
    %83 = vector.extract_strided_slice %80 {offsets = [0, 64], sizes = [8, 32], strides = [1, 1]} : vector<8x128xf32> to vector<8x32xf32>
    %84 = vector.extract_strided_slice %80 {offsets = [0, 96], sizes = [8, 32], strides = [1, 1]} : vector<8x128xf32> to vector<8x32xf32>
    %85 = arith.mulf %82, %69 : vector<8x32xf32>
    %86 = arith.mulf %81, %83 : vector<8x32xf32>
    %87 = arith.addf %85, %86 : vector<8x32xf32>
    %88 = math.tanh %87 : vector<8x32xf32>
    %89 = arith.mulf %84, %88 : vector<8x32xf32>
    %c1_i32_28 = arith.constant 1 : i32
    %c4_i32_29 = arith.constant 4 : i32
    %90 = arith.muli %c1_i32_28, %c4_i32_29 : i32
    %c0_i32_30 = arith.constant 0 : i32
    %91 = arith.addi %90, %c0_i32_30 : i32
    %92 = arith.index_cast %91 : i32 to index
    %c0_31 = arith.constant 0 : index
    %c0_32 = arith.constant 0 : index
    %93 = vector.load %arg1[%92, %c0_31, %c0_32] : memref<8x8x128xf32, #tpu.memory_space<vmem>>, vector<1x8x128xf32>
    %94 = vector.shape_cast %93 : vector<1x8x128xf32> to vector<8x128xf32>
    %cst_33 = arith.constant dense<0.000000e+00> : vector<8x128xf32>
    %95 = tpu.matmul %89, %14, %cst_33 {dimension_numbers = #tpu.dot_dimension_numbers<[1], [0], [0], [1], [0, 0, 1, 1], [], []>} : vector<8x32xf32>, vector<32x128xf32>, vector<8x128xf32> -> vector<8x128xf32>
    %96 = arith.addf %94, %95 : vector<8x128xf32>
    %97 = math.tanh %96 : vector<8x128xf32>
    %98 = arith.mulf %97, %5 : vector<8x128xf32>
    %99 = arith.addf %98, %8 : vector<8x128xf32>
    %100 = vector.extract_strided_slice %99 {offsets = [0, 0], sizes = [8, 32], strides = [1, 1]} : vector<8x128xf32> to vector<8x32xf32>
    %101 = vector.extract_strided_slice %99 {offsets = [0, 32], sizes = [8, 32], strides = [1, 1]} : vector<8x128xf32> to vector<8x32xf32>
    %102 = vector.extract_strided_slice %99 {offsets = [0, 64], sizes = [8, 32], strides = [1, 1]} : vector<8x128xf32> to vector<8x32xf32>
    %103 = vector.extract_strided_slice %99 {offsets = [0, 96], sizes = [8, 32], strides = [1, 1]} : vector<8x128xf32> to vector<8x32xf32>
    %104 = arith.mulf %101, %87 : vector<8x32xf32>
    %105 = arith.mulf %100, %102 : vector<8x32xf32>
    %106 = arith.addf %104, %105 : vector<8x32xf32>
    %107 = math.tanh %106 : vector<8x32xf32>
    %108 = arith.mulf %103, %107 : vector<8x32xf32>
    %c1_i32_34 = arith.constant 1 : i32
    %109 = arith.addi %90, %c1_i32_34 : i32
    %110 = arith.index_cast %109 : i32 to index
    %c0_35 = arith.constant 0 : index
    %c0_36 = arith.constant 0 : index
    %111 = vector.load %arg1[%110, %c0_35, %c0_36] : memref<8x8x128xf32, #tpu.memory_space<vmem>>, vector<1x8x128xf32>
    %112 = vector.shape_cast %111 : vector<1x8x128xf32> to vector<8x128xf32>
    %cst_37 = arith.constant dense<0.000000e+00> : vector<8x128xf32>
    %113 = tpu.matmul %108, %10, %cst_37 {dimension_numbers = #tpu.dot_dimension_numbers<[1], [0], [0], [1], [0, 0, 1, 1], [], []>} : vector<8x32xf32>, vector<32x128xf32>, vector<8x128xf32> -> vector<8x128xf32>
    %114 = arith.addf %112, %113 : vector<8x128xf32>
    %115 = math.tanh %114 : vector<8x128xf32>
    %116 = arith.mulf %115, %5 : vector<8x128xf32>
    %117 = arith.addf %116, %8 : vector<8x128xf32>
    %118 = vector.extract_strided_slice %117 {offsets = [0, 0], sizes = [8, 32], strides = [1, 1]} : vector<8x128xf32> to vector<8x32xf32>
    %119 = vector.extract_strided_slice %117 {offsets = [0, 32], sizes = [8, 32], strides = [1, 1]} : vector<8x128xf32> to vector<8x32xf32>
    %120 = vector.extract_strided_slice %117 {offsets = [0, 64], sizes = [8, 32], strides = [1, 1]} : vector<8x128xf32> to vector<8x32xf32>
    %121 = vector.extract_strided_slice %117 {offsets = [0, 96], sizes = [8, 32], strides = [1, 1]} : vector<8x128xf32> to vector<8x32xf32>
    %122 = arith.mulf %119, %106 : vector<8x32xf32>
    %123 = arith.mulf %118, %120 : vector<8x32xf32>
    %124 = arith.addf %122, %123 : vector<8x32xf32>
    %125 = math.tanh %124 : vector<8x32xf32>
    %126 = arith.mulf %121, %125 : vector<8x32xf32>
    %c2_i32_38 = arith.constant 2 : i32
    %127 = arith.addi %90, %c2_i32_38 : i32
    %128 = arith.index_cast %127 : i32 to index
    %c0_39 = arith.constant 0 : index
    %c0_40 = arith.constant 0 : index
    %129 = vector.load %arg1[%128, %c0_39, %c0_40] : memref<8x8x128xf32, #tpu.memory_space<vmem>>, vector<1x8x128xf32>
    %130 = vector.shape_cast %129 : vector<1x8x128xf32> to vector<8x128xf32>
    %cst_41 = arith.constant dense<0.000000e+00> : vector<8x128xf32>
    %131 = tpu.matmul %126, %12, %cst_41 {dimension_numbers = #tpu.dot_dimension_numbers<[1], [0], [0], [1], [0, 0, 1, 1], [], []>} : vector<8x32xf32>, vector<32x128xf32>, vector<8x128xf32> -> vector<8x128xf32>
    %132 = arith.addf %130, %131 : vector<8x128xf32>
    %133 = math.tanh %132 : vector<8x128xf32>
    %134 = arith.mulf %133, %5 : vector<8x128xf32>
    %135 = arith.addf %134, %8 : vector<8x128xf32>
    %136 = vector.extract_strided_slice %135 {offsets = [0, 0], sizes = [8, 32], strides = [1, 1]} : vector<8x128xf32> to vector<8x32xf32>
    %137 = vector.extract_strided_slice %135 {offsets = [0, 32], sizes = [8, 32], strides = [1, 1]} : vector<8x128xf32> to vector<8x32xf32>
    %138 = vector.extract_strided_slice %135 {offsets = [0, 64], sizes = [8, 32], strides = [1, 1]} : vector<8x128xf32> to vector<8x32xf32>
    %139 = vector.extract_strided_slice %135 {offsets = [0, 96], sizes = [8, 32], strides = [1, 1]} : vector<8x128xf32> to vector<8x32xf32>
    %140 = arith.mulf %137, %124 : vector<8x32xf32>
    %141 = arith.mulf %136, %138 : vector<8x32xf32>
    %142 = arith.addf %140, %141 : vector<8x32xf32>
    %143 = math.tanh %142 : vector<8x32xf32>
    %144 = arith.mulf %139, %143 : vector<8x32xf32>
    %c3_i32_42 = arith.constant 3 : i32
    %145 = arith.addi %90, %c3_i32_42 : i32
    %146 = arith.index_cast %145 : i32 to index
    %c0_43 = arith.constant 0 : index
    %c0_44 = arith.constant 0 : index
    %147 = vector.load %arg1[%146, %c0_43, %c0_44] : memref<8x8x128xf32, #tpu.memory_space<vmem>>, vector<1x8x128xf32>
    %148 = vector.shape_cast %147 : vector<1x8x128xf32> to vector<8x128xf32>
    %cst_45 = arith.constant dense<0.000000e+00> : vector<8x128xf32>
    %149 = tpu.matmul %144, %10, %cst_45 {dimension_numbers = #tpu.dot_dimension_numbers<[1], [0], [0], [1], [0, 0, 1, 1], [], []>} : vector<8x32xf32>, vector<32x128xf32>, vector<8x128xf32> -> vector<8x128xf32>
    %150 = arith.addf %148, %149 : vector<8x128xf32>
    %151 = math.tanh %150 : vector<8x128xf32>
    %152 = arith.mulf %151, %5 : vector<8x128xf32>
    %153 = arith.addf %152, %8 : vector<8x128xf32>
    %154 = vector.extract_strided_slice %153 {offsets = [0, 0], sizes = [8, 32], strides = [1, 1]} : vector<8x128xf32> to vector<8x32xf32>
    %155 = vector.extract_strided_slice %153 {offsets = [0, 32], sizes = [8, 32], strides = [1, 1]} : vector<8x128xf32> to vector<8x32xf32>
    %156 = vector.extract_strided_slice %153 {offsets = [0, 64], sizes = [8, 32], strides = [1, 1]} : vector<8x128xf32> to vector<8x32xf32>
    %157 = vector.extract_strided_slice %153 {offsets = [0, 96], sizes = [8, 32], strides = [1, 1]} : vector<8x128xf32> to vector<8x32xf32>
    %158 = arith.mulf %155, %142 : vector<8x32xf32>
    %159 = arith.mulf %154, %156 : vector<8x32xf32>
    %160 = arith.addf %158, %159 : vector<8x32xf32>
    %161 = math.tanh %160 : vector<8x32xf32>
    %162 = arith.mulf %157, %161 : vector<8x32xf32>
    %c2_i32_46 = arith.constant 2 : i32
    %c0_47 = arith.constant 0 : index
    %c0_48 = arith.constant 0 : index
    %163 = vector.load %arg5[%c0_47, %c0_48] : memref<8x32xf32, #tpu.memory_space<vmem>>, vector<8x32xf32>
    tpu.vector_store %arg5[%c0_47, %c0_48], %162 {strides = array<i32>} : memref<8x32xf32, #tpu.memory_space<vmem>>, vector<8x32xf32>,
    %c0_49 = arith.constant 0 : index
    %c0_50 = arith.constant 0 : index
    %164 = vector.load %arg6[%c0_49, %c0_50] : memref<8x32xf32, #tpu.memory_space<vmem>>, vector<8x32xf32>
    tpu.vector_store %arg6[%c0_49, %c0_50], %160 {strides = array<i32>} : memref<8x32xf32, #tpu.memory_space<vmem>>, vector<8x32xf32>,
    return
  }
  func.func @transform_0(%arg0: i32) -> (i32, i32, i32) {
    %c0_i32 = arith.constant 0 : i32
    %c0_i32_0 = arith.constant 0 : i32
    %c0_i32_1 = arith.constant 0 : i32
    return %arg0, %c0_i32, %c0_i32_0 : i32, i32, i32
  }
  func.func @transform_1(%arg0: i32) -> (i32, i32, i32) {
    %c0_i32 = arith.constant 0 : i32
    %c0_i32_0 = arith.constant 0 : i32
    %c0_i32_1 = arith.constant 0 : i32
    %c0_i32_2 = arith.constant 0 : i32
    return %c0_i32, %c0_i32_0, %c0_i32_1 : i32, i32, i32
  }
  func.func @transform_2(%arg0: i32) -> (i32, i32) {
    %c0_i32 = arith.constant 0 : i32
    %c0_i32_0 = arith.constant 0 : i32
    %c0_i32_1 = arith.constant 0 : i32
    return %c0_i32, %c0_i32_0 : i32, i32
  }
  func.func @transform_3(%arg0: i32) -> (i32, i32) {
    %c0_i32 = arith.constant 0 : i32
    %c0_i32_0 = arith.constant 0 : i32
    %c0_i32_1 = arith.constant 0 : i32
    return %c0_i32, %c0_i32_0 : i32, i32
  }
  func.func @transform_4(%arg0: i32) -> (i32, i32) {
    %c0_i32 = arith.constant 0 : i32
    %c0_i32_0 = arith.constant 0 : i32
    %c0_i32_1 = arith.constant 0 : i32
    return %c0_i32, %c0_i32_0 : i32, i32
  }
}

</mosaic_0001>

<llo_original>
// kernel: tpu_custom_call.1
$region0: #{tpu_custom_call.1}
  #allocation0 [shape = 'u32[]', space=smem, size = 0x4, offset = 0x4, fixed_abs, tag = 'smem constant byte address 0x4 - core index']
  #allocation1 [shape = 'u32[144,128]{1,0:T(1,128)}', space=vmem, size = 0x12000, scoped, tag = 'internal scratch']
  #allocation2 [shape = 'f32[8,32]{1,0:T(8,128)}', space=vmem, size = 0x1000, scoped, tag = 'scratch operand']
  %s0 = inlined_call_operand.hbm [shape: f32[8,8,128], index: 0, kind: input, shape index: {}]
  %s1 = inlined_call_operand.hbm [shape: f32[3,32,128], index: 1, kind: input, shape index: {}]
  %s2 = inlined_call_operand.vmem [shape: f32[1,128], index: 2, kind: input, shape index: {}]
  %s3 = inlined_call_operand.vmem [shape: f32[1,128], index: 3, kind: input, shape index: {}]
  %s4 = inlined_call_operand.hbm [shape: f32[8,32], index: 4, kind: output, shape index: {}]
  %s5 = sld [smem:[#allocation0]]
  $region38: #{tpu_custom_call.1} parent=0
    _
  %s7 = ssub.s32 1, %s5
  %s8 = scalar_select 0, %s7, %s5
  $region1: #{tpu_custom_call.1} parent=0
    #allocation3 [shape = 'u8[32768]{0}', space=vmem, size = 0x8000, scoped, tag = 'input window, operand 0, single buffered']
    #allocation4 [shape = 's32[1]{0}', space=sflag, size = 0x4, scoped, tag = 'scoped memory for tpu_custom_call.1']
    #allocation5 [shape = 's32[1]{0}', space=sflag, size = 0x4, scoped, tag = 'scoped memory for tpu_custom_call.1']
    #allocation6 [shape = 'u8[49152]{0}', space=vmem, size = 0xc000, scoped, tag = 'input window, operand 1, single buffered']
    #allocation7 [shape = 's32[1]{0}', space=sflag, size = 0x4, scoped, tag = 'scoped memory for tpu_custom_call.1']
    #allocation8 [shape = 'u8[4096]{0}', space=vmem, size = 0x1000, scoped, tag = 'output window, operand 0, single buffered']
    %9 = vsyncpa [#allocation4], 0
    %10 = vsyncpa [#allocation7], 0
    %11 = vsyncpa [#allocation5], 0
    // Predicated region
    $region2: #{tpu_custom_call.1} parent=1 // pred_check
      _
    $region3: #{tpu_custom_call.1} parent=1 // pred_check_branch
      %13 = sbr.rel (0) target = $region5
    $region4: #{tpu_custom_call.1} parent=1 // pred_region
      %s15 = ssub.s32 1024, 1024
      %16 = vsyncadd [#allocation4], %s15
      %s17 = sshll.u32 [#allocation3], 4
      %s18 = int_to_ptr.vmem [resolvable:$true] %s17
      %23 = dma.hbm_to_vmem [thread:$0]  %s0, 1024, %s18, [#allocation4], 128, 128, 8
    $region5: #{tpu_custom_call.1} parent=1 // pred_fallthru
      _
    // Predicated region
    $region6: #{tpu_custom_call.1} parent=1 // pred_check
      _
    $region7: #{tpu_custom_call.1} parent=1 // pred_check_branch
      %25 = sbr.rel (0) target = $region9
    $region8: #{tpu_custom_call.1} parent=1 // pred_region
      %s27 = ssub.s32 1536, 1536
      %28 = vsyncadd [#allocation7], %s27
      %s29 = sshll.u32 [#allocation6], 4
      %s30 = int_to_ptr.vmem [resolvable:$true] %s29
      %35 = dma.hbm_to_vmem [thread:$0]  %s1, 1536, %s30, [#allocation7], 128, 128, 8
    $region9: #{tpu_custom_call.1} parent=1 // pred_fallthru
      _
    // Predicated region
    $region10: #{tpu_custom_call.1} parent=1 // pred_check
      _
    $region11: #{tpu_custom_call.1} parent=1 // pred_check_branch
      %37 = sbr.rel (0) target = $region13
    $region12: #{tpu_custom_call.1} parent=1 // pred_region
      _
    $region13: #{tpu_custom_call.1} parent=1 // pred_fallthru
      _
    // Predicated region
    $region14: #{tpu_custom_call.1} parent=1 // pred_check
      _
    $region15: #{tpu_custom_call.1} parent=1 // pred_check_branch
      %39 = sbr.rel (0) target = $region17
    $region16: #{tpu_custom_call.1} parent=1 // pred_region
      _
    $region17: #{tpu_custom_call.1} parent=1 // pred_fallthru
      _
    // Predicated region
    $region18: #{tpu_custom_call.1} parent=1 // pred_check
      _
    $region19: #{tpu_custom_call.1} parent=1 // pred_check_branch
      %41 = sbr.rel (0) target = $region21
    $region20: #{tpu_custom_call.1} parent=1 // pred_region
      %42 = dma.done [#allocation4], 1024
    $region21: #{tpu_custom_call.1} parent=1 // pred_fallthru
      _
    // Predicated region
    $region22: #{tpu_custom_call.1} parent=1 // pred_check
      _
    $region23: #{tpu_custom_call.1} parent=1 // pred_check_branch
      %44 = sbr.rel (0) target = $region25
    $region24: #{tpu_custom_call.1} parent=1 // pred_region
      %45 = dma.done [#allocation7], 1536
    $region25: #{tpu_custom_call.1} parent=1 // pred_fallthru
      _
    %p46 = scmp.eq.s32.totalorder 0, 0
    // Predicated region
    $region26: #{tpu_custom_call.1} parent=1 // pred_check
      %p47 = pneg %p46
    $region27: #{tpu_custom_call.1} parent=1 // pred_check_branch
      %49 = sbr.rel (%p47) target = $region29
    $region28: #{tpu_custom_call.1} parent=1 // pred_region
      %vm50 = vcmask 261120
      %51 = vst.msk [vmem:[#allocation8] sm:$0xff] %vm50, 0.0
      %52 = vst.msk [vmem:[#allocation2] sm:$0xff] %vm50, 0.0
    $region29: #{tpu_custom_call.1} parent=1 // pred_fallthru
      _
    %v53 = vld [vmem:[%s2] sm:$0x1]
    %v55 = vlaneseq
    %v56 = vshrl.u32 %v55, 7
    %v57 = vsub.s32 0, %v56
    %v58 = vrot.slane %v53, %v57
    %v60 = vld [vmem:[%s3] sm:$0x1]
    %v62 = vlaneseq
    %v63 = vshrl.u32 %v62, 7
    %v64 = vsub.s32 0, %v63
    %v65 = vrot.slane %v60, %v64
    %v67 = vld [vmem:[#allocation6] sm:$0xff]
    %v68 = vld [vmem:[#allocation6 + $0x8] sm:$0xff]
    %v69 = vld [vmem:[#allocation6 + $0x10] sm:$0xff]
    %v70 = vld [vmem:[#allocation6 + $0x18] sm:$0xff]
    %s71 = scalar_lea.vmem [#allocation6], 32
    %v72 = vld [vmem:[%s71] sm:$0xff]
    %v73 = vld [vmem:[%s71 + $0x8] sm:$0xff]
    %v74 = vld [vmem:[%s71 + $0x10] sm:$0xff]
    %v75 = vld [vmem:[%s71 + $0x18] sm:$0xff]
    %s76 = scalar_lea.vmem [#allocation6], 64
    %v77 = vld [vmem:[%s76] sm:$0xff]
    %v78 = vld [vmem:[%s76 + $0x8] sm:$0xff]
    %v79 = vld [vmem:[%s76 + $0x10] sm:$0xff]
    %v80 = vld [vmem:[%s76 + $0x18] sm:$0xff]
    %v81 = vld [vmem:[#allocation8] sm:$0xff]
    %v82 = vld [vmem:[#allocation2] sm:$0xff]
    %v83 = vld [vmem:[#allocation3] sm:$0xff]
    %vm84 = vcmask 261120
    %v86 = vsel %vm84, %v81, 0
    %88 = vmatprep.subr.mxu0 0.0
    %89 = vmatpush1.msra.mxu0 %v77
    %90 = vmatprep.subr.mxu0 0.0
    %91 = vmatpush1.msra.mxu0 %v78
    %92 = vmatprep.subr.mxu0 0.0
    %93 = vmatpush1.msra.mxu0 %v79
    %94 = vmatprep.subr.mxu0 0.0
    %95 = vmatpush1.msra.mxu0 %v80
    %96 = vmatprep.subr.mxu0 0.0
    %97 = vmatpush1.msra.mxu0 0.0
    %98 = vmatprep.subr.mxu0 0.0
    %99 = vmatpush1.msra.mxu0 0.0
    %100 = vmatprep.subr.mxu0 0.0
    %101 = vmatpush1.msra.mxu0 0.0
    %102 = vmatprep.subr.mxu0 0.0
    %103 = vmatpush1.msra.mxu0 0.0
    %104 = vmatprep.subr.mxu0 0.0
    %105 = vmatpush1.msra.mxu0 0.0
    %106 = vmatprep.subr.mxu0 0.0
    %107 = vmatpush1.msra.mxu0 0.0
    %108 = vmatprep.subr.mxu0 0.0
    %109 = vmatpush1.msra.mxu0 0.0
    %110 = vmatprep.subr.mxu0 0.0
    %111 = vmatpush1.msra.mxu0 0.0
    %112 = vmatprep.subr.mxu0 0.0
    %113 = vmatpush1.msra.mxu0 0.0
    %114 = vmatprep.subr.mxu0 0.0
    %115 = vmatpush1.msra.mxu0 0.0
    %116 = vmatprep.subr.mxu0 0.0
    %117 = vmatpush1.msra.mxu0 0.0
    %118 = vmatprep.subr.mxu0 0.0
    %119 = vmatpush1.msra.mxu0 0.0
    %120 = vmatprep.subr.mxu0 0.0
    %121 = vmatpush1.msra.mxu0 0.0
    %122 = vmatprep.subr.mxu0 0.0
    %123 = vmatpush1.msra.mxu0 0.0
    %124 = vmatprep.subr.mxu0 0.0
    %125 = vmatpush1.msra.mxu0 0.0
    %126 = vmatprep.subr.mxu0 0.0
    %127 = vmatpush1.msra.mxu0 0.0
    %128 = vmatprep.subr.mxu0 0.0
    %129 = vmatpush1.msra.mxu0 0.0
    %130 = vmatprep.subr.mxu0 0.0
    %131 = vmatpush1.msra.mxu0 0.0
    %132 = vmatprep.subr.mxu0 0.0
    %133 = vmatpush1.msra.mxu0 0.0
    %134 = vmatprep.subr.mxu0 0.0
    %135 = vmatpush1.msra.mxu0 0.0
    %136 = vmatprep.subr.mxu0 0.0
    %137 = vmatpush1.msra.mxu0 0.0
    %138 = vmatprep.subr.mxu0 0.0
    %139 = vmatpush1.msra.mxu0 0.0
    %140 = vmatprep.subr.mxu0 0.0
    %141 = vmatpush1.msra.mxu0 0.0
    %142 = vmatprep.subr.mxu0 0.0
    %143 = vmatpush1.msra.mxu0 0.0
    %144 = vmatprep.subr.mxu0 0.0
    %145 = vmatpush1.msra.mxu0 0.0
    %146 = vmatprep.subr.mxu0 0.0
    %147 = vmatpush1.msra.mxu0 0.0
    %148 = vmatprep.subr.mxu0 0.0
    %149 = vmatpush1.msra.mxu0 0.0
    %150 = vmatprep.subr.mxu0 0.0
    %151 = vmatpush1.msra.mxu0 0.0
    %152 = vmatprep.mubr.f32.mxu0 0.0
    %153 = vmatmul.mubr.f32.gmra.mrb[0].mxu0 %v86
    %v154 = vpop.f32.mrb[0].mxu0
    %v155 = vadd.f32 0.0, %v154
    %v156 = vpop.f32.mrb[0].mxu0
    %157 = vdwg.mxu0
    %v158 = vadd.f32 %v83, %v155
    %v159 = vtanh.pop %v158
    %v160 = vmul.f32 %v159, %v58
    %v161 = vadd.f32 %v160, %v65
    %163 = vrot.lane.b32.xlu0 %v82, 32
    %v164 = vpop.permute.xlu0 %163
    %v166 = vmul.f32 %v161, %v164
    %168 = vrot.lane.b32.xlu0 %v161, 64
    %v169 = vpop.permute.xlu0 %168
    %v171 = vmul.f32 %v161, %v169
    %173 = vrot.lane.b32.xlu0 %v171, 32
    %v174 = vpop.permute.xlu0 %173
    %v176 = vadd.f32 %v166, %v174
    %v177 = vtanh.pop %v176
    %179 = vrot.lane.b32.xlu0 %v177, 64
    %v180 = vpop.permute.xlu0 %179
    %v182 = vmul.f32 %v161, %v180
    %s183 = scalar_lea.vmem [#allocation3], 8
    %v184 = vld [vmem:[%s183] sm:$0xff]
    %186 = vrot.lane.b32.xlu0 %v182, 32
    %v187 = vpop.permute.xlu0 %186
    %v188 = vsel %vm84, %v187, 0
    %190 = vmatprep.subr.mxu0 0.0
    %191 = vmatpush1.msra.mxu0 %v67
    %192 = vmatprep.subr.mxu0 0.0
    %193 = vmatpush1.msra.mxu0 %v68
    %194 = vmatprep.subr.mxu0 0.0
    %195 = vmatpush1.msra.mxu0 %v69
    %196 = vmatprep.subr.mxu0 0.0
    %197 = vmatpush1.msra.mxu0 %v70
    %198 = vmatprep.subr.mxu0 0.0
    %199 = vmatpush1.msra.mxu0 0.0
    %200 = vmatprep.subr.mxu0 0.0
    %201 = vmatpush1.msra.mxu0 0.0
    %202 = vmatprep.subr.mxu0 0.0
    %203 = vmatpush1.msra.mxu0 0.0
    %204 = vmatprep.subr.mxu0 0.0
    %205 = vmatpush1.msra.mxu0 0.0
    %206 = vmatprep.subr.mxu0 0.0
    %207 = vmatpush1.msra.mxu0 0.0
    %208 = vmatprep.subr.mxu0 0.0
    %209 = vmatpush1.msra.mxu0 0.0
    %210 = vmatprep.subr.mxu0 0.0
    %211 = vmatpush1.msra.mxu0 0.0
    %212 = vmatprep.subr.mxu0 0.0
    %213 = vmatpush1.msra.mxu0 0.0
    %214 = vmatprep.subr.mxu0 0.0
    %215 = vmatpush1.msra.mxu0 0.0
    %216 = vmatprep.subr.mxu0 0.0
    %217 = vmatpush1.msra.mxu0 0.0
    %218 = vmatprep.subr.mxu0 0.0
    %219 = vmatpush1.msra.mxu0 0.0
    %220 = vmatprep.subr.mxu0 0.0
    %221 = vmatpush1.msra.mxu0 0.0
    %222 = vmatprep.subr.mxu0 0.0
    %223 = vmatpush1.msra.mxu0 0.0
    %224 = vmatprep.subr.mxu0 0.0
    %225 = vmatpush1.msra.mxu0 0.0
    %226 = vmatprep.subr.mxu0 0.0
    %227 = vmatpush1.msra.mxu0 0.0
    %228 = vmatprep.subr.mxu0 0.0
    %229 = vmatpush1.msra.mxu0 0.0
    %230 = vmatprep.subr.mxu0 0.0
    %231 = vmatpush1.msra.mxu0 0.0
    %232 = vmatprep.subr.mxu0 0.0
    %233 = vmatpush1.msra.mxu0 0.0
    %234 = vmatprep.subr.mxu0 0.0
    %235 = vmatpush1.msra.mxu0 0.0
    %236 = vmatprep.subr.mxu0 0.0
    %237 = vmatpush1.msra.mxu0 0.0
    %238 = vmatprep.subr.mxu0 0.0
    %239 = vmatpush1.msra.mxu0 0.0
    %240 = vmatprep.subr.mxu0 0.0
    %241 = vmatpush1.msra.mxu0 0.0
    %242 = vmatprep.subr.mxu0 0.0
    %243 = vmatpush1.msra.mxu0 0.0
    %244 = vmatprep.subr.mxu0 0.0
    %245 = vmatpush1.msra.mxu0 0.0
    %246 = vmatprep.subr.mxu0 0.0
    %247 = vmatpush1.msra.mxu0 0.0
    %248 = vmatprep.subr.mxu0 0.0
    %249 = vmatpush1.msra.mxu0 0.0
    %250 = vmatprep.subr.mxu0 0.0
    %251 = vmatpush1.msra.mxu0 0.0
    %252 = vmatprep.subr.mxu0 0.0
    %253 = vmatpush1.msra.mxu0 0.0
    %254 = vmatprep.mubr.f32.mxu0 0.0
    %255 = vmatmul.mubr.f32.gmra.mrb[0].mxu0 %v188
    %v256 = vpop.f32.mrb[0].mxu0
    %v257 = vadd.f32 0.0, %v256
    %v258 = vpop.f32.mrb[0].mxu0
    %259 = vdwg.mxu0
    %v260 = vadd.f32 %v184, %v257
    %v261 = vtanh.pop %v260
    %v262 = vmul.f32 %v261, %v58
    %v263 = vadd.f32 %v262, %v65
    %v264 = vmul.f32 %v263, %v176
    %266 = vrot.lane.b32.xlu0 %v263, 64
    %v267 = vpop.permute.xlu0 %266
    %v269 = vmul.f32 %v263, %v267
    %271 = vrot.lane.b32.xlu0 %v269, 32
    %v272 = vpop.permute.xlu0 %271
    %v274 = vadd.f32 %v264, %v272
    %v275 = vtanh.pop %v274
    %277 = vrot.lane.b32.xlu0 %v275, 64
    %v278 = vpop.permute.xlu0 %277
    %v280 = vmul.f32 %v263, %v278
    %s281 = scalar_lea.vmem [#allocation3], 16
    %v282 = vld [vmem:[%s281] sm:$0xff]
    %284 = vrot.lane.b32.xlu0 %v280, 32
    %v285 = vpop.permute.xlu0 %284
    %v286 = vsel %vm84, %v285, 0
    %288 = vmatprep.subr.mxu0 0.0
    %289 = vmatpush1.msra.mxu0 %v72
    %290 = vmatprep.subr.mxu0 0.0
    %291 = vmatpush1.msra.mxu0 %v73
    %292 = vmatprep.subr.mxu0 0.0
    %293 = vmatpush1.msra.mxu0 %v74
    %294 = vmatprep.subr.mxu0 0.0
    %295 = vmatpush1.msra.mxu0 %v75
    %296 = vmatprep.subr.mxu0 0.0
    %297 = vmatpush1.msra.mxu0 0.0
    %298 = vmatprep.subr.mxu0 0.0
    %299 = vmatpush1.msra.mxu0 0.0
    %300 = vmatprep.subr.mxu0 0.0
    %301 = vmatpush1.msra.mxu0 0.0
    %302 = vmatprep.subr.mxu0 0.0
    %303 = vmatpush1.msra.mxu0 0.0
    %304 = vmatprep.subr.mxu0 0.0
    %305 = vmatpush1.msra.mxu0 0.0
    %306 = vmatprep.subr.mxu0 0.0
    %307 = vmatpush1.msra.mxu0 0.0
    %308 = vmatprep.subr.mxu0 0.0
    %309 = vmatpush1.msra.mxu0 0.0
    %310 = vmatprep.subr.mxu0 0.0
    %311 = vmatpush1.msra.mxu0 0.0
    %312 = vmatprep.subr.mxu0 0.0
    %313 = vmatpush1.msra.mxu0 0.0
    %314 = vmatprep.subr.mxu0 0.0
    %315 = vmatpush1.msra.mxu0 0.0
    %316 = vmatprep.subr.mxu0 0.0
    %317 = vmatpush1.msra.mxu0 0.0
    %318 = vmatprep.subr.mxu0 0.0
    %319 = vmatpush1.msra.mxu0 0.0
    %320 = vmatprep.subr.mxu0 0.0
    %321 = vmatpush1.msra.mxu0 0.0
    %322 = vmatprep.subr.mxu0 0.0
    %323 = vmatpush1.msra.mxu0 0.0
    %324 = vmatprep.subr.mxu0 0.0
    %325 = vmatpush1.msra.mxu0 0.0
    %326 = vmatprep.subr.mxu0 0.0
    %327 = vmatpush1.msra.mxu0 0.0
    %328 = vmatprep.subr.mxu0 0.0
    %329 = vmatpush1.msra.mxu0 0.0
    %330 = vmatprep.subr.mxu0 0.0
    %331 = vmatpush1.msra.mxu0 0.0
    %332 = vmatprep.subr.mxu0 0.0
    %333 = vmatpush1.msra.mxu0 0.0
    %334 = vmatprep.subr.mxu0 0.0
    %335 = vmatpush1.msra.mxu0 0.0
    %336 = vmatprep.subr.mxu0 0.0
    %337 = vmatpush1.msra.mxu0 0.0
    %338 = vmatprep.subr.mxu0 0.0
    %339 = vmatpush1.msra.mxu0 0.0
    %340 = vmatprep.subr.mxu0 0.0
    %341 = vmatpush1.msra.mxu0 0.0
    %342 = vmatprep.subr.mxu0 0.0
    %343 = vmatpush1.msra.mxu0 0.0
    %344 = vmatprep.subr.mxu0 0.0
    %345 = vmatpush1.msra.mxu0 0.0
    %346 = vmatprep.subr.mxu0 0.0
    %347 = vmatpush1.msra.mxu0 0.0
    %348 = vmatprep.subr.mxu0 0.0
    %349 = vmatpush1.msra.mxu0 0.0
    %350 = vmatprep.subr.mxu0 0.0
    %351 = vmatpush1.msra.mxu0 0.0
    %352 = vmatprep.mubr.f32.mxu0 0.0
    %353 = vmatmul.mubr.f32.gmra.mrb[0].mxu0 %v286
    %v354 = vpop.f32.mrb[0].mxu0
    %v355 = vadd.f32 0.0, %v354
    %v356 = vpop.f32.mrb[0].mxu0
    %357 = vdwg.mxu0
    %v358 = vadd.f32 %v282, %v355
    %v359 = vtanh.pop %v358
    %v360 = vmul.f32 %v359, %v58
    %v361 = vadd.f32 %v360, %v65
    %v362 = vmul.f32 %v361, %v274
    %364 = vrot.lane.b32.xlu0 %v361, 64
    %v365 = vpop.permute.xlu0 %364
    %v367 = vmul.f32 %v361, %v365
    %369 = vrot.lane.b32.xlu0 %v367, 32
    %v370 = vpop.permute.xlu0 %369
    %v372 = vadd.f32 %v362, %v370
    %v373 = vtanh.pop %v372
    %375 = vrot.lane.b32.xlu0 %v373, 64
    %v376 = vpop.permute.xlu0 %375
    %v378 = vmul.f32 %v361, %v376
    %s379 = scalar_lea.vmem [#allocation3], 24
    %v380 = vld [vmem:[%s379] sm:$0xff]
    %382 = vrot.lane.b32.xlu0 %v378, 32
    %v383 = vpop.permute.xlu0 %382
    %v384 = vsel %vm84, %v383, 0
    %386 = vmatprep.subr.mxu0 0.0
    %387 = vmatpush1.msra.mxu0 %v67
    %388 = vmatprep.subr.mxu0 0.0
    %389 = vmatpush1.msra.mxu0 %v68
    %390 = vmatprep.subr.mxu0 0.0
    %391 = vmatpush1.msra.mxu0 %v69
    %392 = vmatprep.subr.mxu0 0.0
    %393 = vmatpush1.msra.mxu0 %v70
    %394 = vmatprep.subr.mxu0 0.0
    %395 = vmatpush1.msra.mxu0 0.0
    %396 = vmatprep.subr.mxu0 0.0
    %397 = vmatpush1.msra.mxu0 0.0
    %398 = vmatprep.subr.mxu0 0.0
    %399 = vmatpush1.msra.mxu0 0.0
    %400 = vmatprep.subr.mxu0 0.0
    %401 = vmatpush1.msra.mxu0 0.0
    %402 = vmatprep.subr.mxu0 0.0
    %403 = vmatpush1.msra.mxu0 0.0
    %404 = vmatprep.subr.mxu0 0.0
    %405 = vmatpush1.msra.mxu0 0.0
    %406 = vmatprep.subr.mxu0 0.0
    %407 = vmatpush1.msra.mxu0 0.0
    %408 = vmatprep.subr.mxu0 0.0
    %409 = vmatpush1.msra.mxu0 0.0
    %410 = vmatprep.subr.mxu0 0.0
    %411 = vmatpush1.msra.mxu0 0.0
    %412 = vmatprep.subr.mxu0 0.0
    %413 = vmatpush1.msra.mxu0 0.0
    %414 = vmatprep.subr.mxu0 0.0
    %415 = vmatpush1.msra.mxu0 0.0
    %416 = vmatprep.subr.mxu0 0.0
    %417 = vmatpush1.msra.mxu0 0.0
    %418 = vmatprep.subr.mxu0 0.0
    %419 = vmatpush1.msra.mxu0 0.0
    %420 = vmatprep.subr.mxu0 0.0
    %421 = vmatpush1.msra.mxu0 0.0
    %422 = vmatprep.subr.mxu0 0.0
    %423 = vmatpush1.msra.mxu0 0.0
    %424 = vmatprep.subr.mxu0 0.0
    %425 = vmatpush1.msra.mxu0 0.0
    %426 = vmatprep.subr.mxu0 0.0
    %427 = vmatpush1.msra.mxu0 0.0
    %428 = vmatprep.subr.mxu0 0.0
    %429 = vmatpush1.msra.mxu0 0.0
    %430 = vmatprep.subr.mxu0 0.0
    %431 = vmatpush1.msra.mxu0 0.0
    %432 = vmatprep.subr.mxu0 0.0
    %433 = vmatpush1.msra.mxu0 0.0
    %434 = vmatprep.subr.mxu0 0.0
    %435 = vmatpush1.msra.mxu0 0.0
    %436 = vmatprep.subr.mxu0 0.0
    %437 = vmatpush1.msra.mxu0 0.0
    %438 = vmatprep.subr.mxu0 0.0
    %439 = vmatpush1.msra.mxu0 0.0
    %440 = vmatprep.subr.mxu0 0.0
    %441 = vmatpush1.msra.mxu0 0.0
    %442 = vmatprep.subr.mxu0 0.0
    %443 = vmatpush1.msra.mxu0 0.0
    %444 = vmatprep.subr.mxu0 0.0
    %445 = vmatpush1.msra.mxu0 0.0
    %446 = vmatprep.subr.mxu0 0.0
    %447 = vmatpush1.msra.mxu0 0.0
    %448 = vmatprep.subr.mxu0 0.0
    %449 = vmatpush1.msra.mxu0 0.0
    %450 = vmatprep.mubr.f32.mxu0 0.0
    %451 = vmatmul.mubr.f32.gmra.mrb[0].mxu0 %v384
    %v452 = vpop.f32.mrb[0].mxu0
    %v453 = vadd.f32 0.0, %v452
    %v454 = vpop.f32.mrb[0].mxu0
    %455 = vdwg.mxu0
    %v456 = vadd.f32 %v380, %v453
    %v457 = vtanh.pop %v456
    %v458 = vmul.f32 %v457, %v58
    %v459 = vadd.f32 %v458, %v65
    %v460 = vmul.f32 %v459, %v372
    %462 = vrot.lane.b32.xlu0 %v459, 64
    %v463 = vpop.permute.xlu0 %462
    %v465 = vmul.f32 %v459, %v463
    %467 = vrot.lane.b32.xlu0 %v465, 32
    %v468 = vpop.permute.xlu0 %467
    %v470 = vadd.f32 %v460, %v468
    %v471 = vtanh.pop %v470
    %473 = vrot.lane.b32.xlu0 %v471, 64
    %v474 = vpop.permute.xlu0 %473
    %v476 = vmul.f32 %v459, %v474
    %s477 = scalar_lea.vmem [#allocation3], 32
    %v478 = vld [vmem:[%s477] sm:$0xff]
    %480 = vrot.lane.b32.xlu0 %v476, 32
    %v481 = vpop.permute.xlu0 %480
    %v482 = vsel %vm84, %v481, 0
    %484 = vmatprep.subr.mxu0 0.0
    %485 = vmatpush1.msra.mxu0 %v77
    %486 = vmatprep.subr.mxu0 0.0
    %487 = vmatpush1.msra.mxu0 %v78
    %488 = vmatprep.subr.mxu0 0.0
    %489 = vmatpush1.msra.mxu0 %v79
    %490 = vmatprep.subr.mxu0 0.0
    %491 = vmatpush1.msra.mxu0 %v80
    %492 = vmatprep.subr.mxu0 0.0
    %493 = vmatpush1.msra.mxu0 0.0
    %494 = vmatprep.subr.mxu0 0.0
    %495 = vmatpush1.msra.mxu0 0.0
    %496 = vmatprep.subr.mxu0 0.0
    %497 = vmatpush1.msra.mxu0 0.0
    %498 = vmatprep.subr.mxu0 0.0
    %499 = vmatpush1.msra.mxu0 0.0
    %500 = vmatprep.subr.mxu0 0.0
    %501 = vmatpush1.msra.mxu0 0.0
    %502 = vmatprep.subr.mxu0 0.0
    %503 = vmatpush1.msra.mxu0 0.0
    %504 = vmatprep.subr.mxu0 0.0
    %505 = vmatpush1.msra.mxu0 0.0
    %506 = vmatprep.subr.mxu0 0.0
    %507 = vmatpush1.msra.mxu0 0.0
    %508 = vmatprep.subr.mxu0 0.0
    %509 = vmatpush1.msra.mxu0 0.0
    %510 = vmatprep.subr.mxu0 0.0
    %511 = vmatpush1.msra.mxu0 0.0
    %512 = vmatprep.subr.mxu0 0.0
    %513 = vmatpush1.msra.mxu0 0.0
    %514 = vmatprep.subr.mxu0 0.0
    %515 = vmatpush1.msra.mxu0 0.0
    %516 = vmatprep.subr.mxu0 0.0
    %517 = vmatpush1.msra.mxu0 0.0
    %518 = vmatprep.subr.mxu0 0.0
    %519 = vmatpush1.msra.mxu0 0.0
    %520 = vmatprep.subr.mxu0 0.0
    %521 = vmatpush1.msra.mxu0 0.0
    %522 = vmatprep.subr.mxu0 0.0
    %523 = vmatpush1.msra.mxu0 0.0
    %524 = vmatprep.subr.mxu0 0.0
    %525 = vmatpush1.msra.mxu0 0.0
    %526 = vmatprep.subr.mxu0 0.0
    %527 = vmatpush1.msra.mxu0 0.0
    %528 = vmatprep.subr.mxu0 0.0
    %529 = vmatpush1.msra.mxu0 0.0
    %530 = vmatprep.subr.mxu0 0.0
    %531 = vmatpush1.msra.mxu0 0.0
    %532 = vmatprep.subr.mxu0 0.0
    %533 = vmatpush1.msra.mxu0 0.0
    %534 = vmatprep.subr.mxu0 0.0
    %535 = vmatpush1.msra.mxu0 0.0
    %536 = vmatprep.subr.mxu0 0.0
    %537 = vmatpush1.msra.mxu0 0.0
    %538 = vmatprep.subr.mxu0 0.0
    %539 = vmatpush1.msra.mxu0 0.0
    %540 = vmatprep.subr.mxu0 0.0
    %541 = vmatpush1.msra.mxu0 0.0
    %542 = vmatprep.subr.mxu0 0.0
    %543 = vmatpush1.msra.mxu0 0.0
    %544 = vmatprep.subr.mxu0 0.0
    %545 = vmatpush1.msra.mxu0 0.0
    %546 = vmatprep.subr.mxu0 0.0
    %547 = vmatpush1.msra.mxu0 0.0
    %548 = vmatprep.mubr.f32.mxu0 0.0
    %549 = vmatmul.mubr.f32.gmra.mrb[0].mxu0 %v482
    %v550 = vpop.f32.mrb[0].mxu0
    %v551 = vadd.f32 0.0, %v550
    %v552 = vpop.f32.mrb[0].mxu0
    %553 = vdwg.mxu0
    %v554 = vadd.f32 %v478, %v551
    %v555 = vtanh.pop %v554
    %v556 = vmul.f32 %v555, %v58
    %v557 = vadd.f32 %v556, %v65
    %v558 = vmul.f32 %v557, %v470
    %560 = vrot.lane.b32.xlu0 %v557, 64
    %v561 = vpop.permute.xlu0 %560
    %v563 = vmul.f32 %v557, %v561
    %565 = vrot.lane.b32.xlu0 %v563, 32
    %v566 = vpop.permute.xlu0 %565
    %v568 = vadd.f32 %v558, %v566
    %v569 = vtanh.pop %v568
    %571 = vrot.lane.b32.xlu0 %v569, 64
    %v572 = vpop.permute.xlu0 %571
    %v574 = vmul.f32 %v557, %v572
    %s575 = scalar_lea.vmem [#allocation3], 40
    %v576 = vld [vmem:[%s575] sm:$0xff]
    %578 = vrot.lane.b32.xlu0 %v574, 32
    %v579 = vpop.permute.xlu0 %578
    %v580 = vsel %vm84, %v579, 0
    %582 = vmatprep.subr.mxu0 0.0
    %583 = vmatpush1.msra.mxu0 %v67
    %584 = vmatprep.subr.mxu0 0.0
    %585 = vmatpush1.msra.mxu0 %v68
    %586 = vmatprep.subr.mxu0 0.0
    %587 = vmatpush1.msra.mxu0 %v69
    %588 = vmatprep.subr.mxu0 0.0
    %589 = vmatpush1.msra.mxu0 %v70
    %590 = vmatprep.subr.mxu0 0.0
    %591 = vmatpush1.msra.mxu0 0.0
    %592 = vmatprep.subr.mxu0 0.0
    %593 = vmatpush1.msra.mxu0 0.0
    %594 = vmatprep.subr.mxu0 0.0
    %595 = vmatpush1.msra.mxu0 0.0
    %596 = vmatprep.subr.mxu0 0.0
    %597 = vmatpush1.msra.mxu0 0.0
    %598 = vmatprep.subr.mxu0 0.0
    %599 = vmatpush1.msra.mxu0 0.0
    %600 = vmatprep.subr.mxu0 0.0
    %601 = vmatpush1.msra.mxu0 0.0
    %602 = vmatprep.subr.mxu0 0.0
    %603 = vmatpush1.msra.mxu0 0.0
    %604 = vmatprep.subr.mxu0 0.0
    %605 = vmatpush1.msra.mxu0 0.0
    %606 = vmatprep.subr.mxu0 0.0
    %607 = vmatpush1.msra.mxu0 0.0
    %608 = vmatprep.subr.mxu0 0.0
    %609 = vmatpush1.msra.mxu0 0.0
    %610 = vmatprep.subr.mxu0 0.0
    %611 = vmatpush1.msra.mxu0 0.0
    %612 = vmatprep.subr.mxu0 0.0
    %613 = vmatpush1.msra.mxu0 0.0
    %614 = vmatprep.subr.mxu0 0.0
    %615 = vmatpush1.msra.mxu0 0.0
    %616 = vmatprep.subr.mxu0 0.0
    %617 = vmatpush1.msra.mxu0 0.0
    %618 = vmatprep.subr.mxu0 0.0
    %619 = vmatpush1.msra.mxu0 0.0
    %620 = vmatprep.subr.mxu0 0.0
    %621 = vmatpush1.msra.mxu0 0.0
    %622 = vmatprep.subr.mxu0 0.0
    %623 = vmatpush1.msra.mxu0 0.0
    %624 = vmatprep.subr.mxu0 0.0
    %625 = vmatpush1.msra.mxu0 0.0
    %626 = vmatprep.subr.mxu0 0.0
    %627 = vmatpush1.msra.mxu0 0.0
    %628 = vmatprep.subr.mxu0 0.0
    %629 = vmatpush1.msra.mxu0 0.0
    %630 = vmatprep.subr.mxu0 0.0
    %631 = vmatpush1.msra.mxu0 0.0
    %632 = vmatprep.subr.mxu0 0.0
    %633 = vmatpush1.msra.mxu0 0.0
    %634 = vmatprep.subr.mxu0 0.0
    %635 = vmatpush1.msra.mxu0 0.0
    %636 = vmatprep.subr.mxu0 0.0
    %637 = vmatpush1.msra.mxu0 0.0
    %638 = vmatprep.subr.mxu0 0.0
    %639 = vmatpush1.msra.mxu0 0.0
    %640 = vmatprep.subr.mxu0 0.0
    %641 = vmatpush1.msra.mxu0 0.0
    %642 = vmatprep.subr.mxu0 0.0
    %643 = vmatpush1.msra.mxu0 0.0
    %644 = vmatprep.subr.mxu0 0.0
    %645 = vmatpush1.msra.mxu0 0.0
    %646 = vmatprep.mubr.f32.mxu0 0.0
    %647 = vmatmul.mubr.f32.gmra.mrb[0].mxu0 %v580
    %v648 = vpop.f32.mrb[0].mxu0
    %v649 = vadd.f32 0.0, %v648
    %v650 = vpop.f32.mrb[0].mxu0
    %651 = vdwg.mxu0
    %v652 = vadd.f32 %v576, %v649
    %v653 = vtanh.pop %v652
    %v654 = vmul.f32 %v653, %v58
    %v655 = vadd.f32 %v654, %v65
    %v656 = vmul.f32 %v655, %v568
    %658 = vrot.lane.b32.xlu0 %v655, 64
    %v659 = vpop.permute.xlu0 %658
    %v661 = vmul.f32 %v655, %v659
    %663 = vrot.lane.b32.xlu0 %v661, 32
    %v664 = vpop.permute.xlu0 %663
    %v666 = vadd.f32 %v656, %v664
    %v667 = vtanh.pop %v666
    %669 = vrot.lane.b32.xlu0 %v667, 64
    %v670 = vpop.permute.xlu0 %669
    %v672 = vmul.f32 %v655, %v670
    %s673 = scalar_lea.vmem [#allocation3], 48
    %v674 = vld [vmem:[%s673] sm:$0xff]
    %676 = vrot.lane.b32.xlu0 %v672, 32
    %v677 = vpop.permute.xlu0 %676
    %v678 = vsel %vm84, %v677, 0
    %680 = vmatprep.subr.mxu0 0.0
    %681 = vmatpush1.msra.mxu0 %v72
    %682 = vmatprep.subr.mxu0 0.0
    %683 = vmatpush1.msra.mxu0 %v73
    %684 = vmatprep.subr.mxu0 0.0
    %685 = vmatpush1.msra.mxu0 %v74
    %686 = vmatprep.subr.mxu0 0.0
    %687 = vmatpush1.msra.mxu0 %v75
    %688 = vmatprep.subr.mxu0 0.0
    %689 = vmatpush1.msra.mxu0 0.0
    %690 = vmatprep.subr.mxu0 0.0
    %691 = vmatpush1.msra.mxu0 0.0
    %692 = vmatprep.subr.mxu0 0.0
    %693 = vmatpush1.msra.mxu0 0.0
    %694 = vmatprep.subr.mxu0 0.0
    %695 = vmatpush1.msra.mxu0 0.0
    %696 = vmatprep.subr.mxu0 0.0
    %697 = vmatpush1.msra.mxu0 0.0
    %698 = vmatprep.subr.mxu0 0.0
    %699 = vmatpush1.msra.mxu0 0.0
    %700 = vmatprep.subr.mxu0 0.0
    %701 = vmatpush1.msra.mxu0 0.0
    %702 = vmatprep.subr.mxu0 0.0
    %703 = vmatpush1.msra.mxu0 0.0
    %704 = vmatprep.subr.mxu0 0.0
    %705 = vmatpush1.msra.mxu0 0.0
    %706 = vmatprep.subr.mxu0 0.0
    %707 = vmatpush1.msra.mxu0 0.0
    %708 = vmatprep.subr.mxu0 0.0
    %709 = vmatpush1.msra.mxu0 0.0
    %710 = vmatprep.subr.mxu0 0.0
    %711 = vmatpush1.msra.mxu0 0.0
    %712 = vmatprep.subr.mxu0 0.0
    %713 = vmatpush1.msra.mxu0 0.0
    %714 = vmatprep.subr.mxu0 0.0
    %715 = vmatpush1.msra.mxu0 0.0
    %716 = vmatprep.subr.mxu0 0.0
    %717 = vmatpush1.msra.mxu0 0.0
    %718 = vmatprep.subr.mxu0 0.0
    %719 = vmatpush1.msra.mxu0 0.0
    %720 = vmatprep.subr.mxu0 0.0
    %721 = vmatpush1.msra.mxu0 0.0
    %722 = vmatprep.subr.mxu0 0.0
    %723 = vmatpush1.msra.mxu0 0.0
    %724 = vmatprep.subr.mxu0 0.0
    %725 = vmatpush1.msra.mxu0 0.0
    %726 = vmatprep.subr.mxu0 0.0
    %727 = vmatpush1.msra.mxu0 0.0
    %728 = vmatprep.subr.mxu0 0.0
    %729 = vmatpush1.msra.mxu0 0.0
    %730 = vmatprep.subr.mxu0 0.0
    %731 = vmatpush1.msra.mxu0 0.0
    %732 = vmatprep.subr.mxu0 0.0
    %733 = vmatpush1.msra.mxu0 0.0
    %734 = vmatprep.subr.mxu0 0.0
    %735 = vmatpush1.msra.mxu0 0.0
    %736 = vmatprep.subr.mxu0 0.0
    %737 = vmatpush1.msra.mxu0 0.0
    %738 = vmatprep.subr.mxu0 0.0
    %739 = vmatpush1.msra.mxu0 0.0
    %740 = vmatprep.subr.mxu0 0.0
    %741 = vmatpush1.msra.mxu0 0.0
    %742 = vmatprep.subr.mxu0 0.0
    %743 = vmatpush1.msra.mxu0 0.0
    %744 = vmatprep.mubr.f32.mxu0 0.0
    %745 = vmatmul.mubr.f32.gmra.mrb[0].mxu0 %v678
    %v746 = vpop.f32.mrb[0].mxu0
    %v747 = vadd.f32 0.0, %v746
    %v748 = vpop.f32.mrb[0].mxu0
    %749 = vdwg.mxu0
    %v750 = vadd.f32 %v674, %v747
    %v751 = vtanh.pop %v750
    %v752 = vmul.f32 %v751, %v58
    %v753 = vadd.f32 %v752, %v65
    %v754 = vmul.f32 %v753, %v666
    %756 = vrot.lane.b32.xlu0 %v753, 64
    %v757 = vpop.permute.xlu0 %756
    %v759 = vmul.f32 %v753, %v757
    %761 = vrot.lane.b32.xlu0 %v759, 32
    %v762 = vpop.permute.xlu0 %761
    %v764 = vadd.f32 %v754, %v762
    %v765 = vtanh.pop %v764
    %767 = vrot.lane.b32.xlu0 %v765, 64
    %v768 = vpop.permute.xlu0 %767
    %v770 = vmul.f32 %v753, %v768
    %s771 = scalar_lea.vmem [#allocation3], 56
    %v772 = vld [vmem:[%s771] sm:$0xff]
    %774 = vrot.lane.b32.xlu0 %v770, 32
    %v775 = vpop.permute.xlu0 %774
    %v776 = vsel %vm84, %v775, 0
    %778 = vmatprep.subr.mxu0 0.0
    %779 = vmatpush1.msra.mxu0 %v67
    %780 = vmatprep.subr.mxu0 0.0
    %781 = vmatpush1.msra.mxu0 %v68
    %782 = vmatprep.subr.mxu0 0.0
    %783 = vmatpush1.msra.mxu0 %v69
    %784 = vmatprep.subr.mxu0 0.0
    %785 = vmatpush1.msra.mxu0 %v70
    %786 = vmatprep.subr.mxu0 0.0
    %787 = vmatpush1.msra.mxu0 0.0
    %788 = vmatprep.subr.mxu0 0.0
    %789 = vmatpush1.msra.mxu0 0.0
    %790 = vmatprep.subr.mxu0 0.0
    %791 = vmatpush1.msra.mxu0 0.0
    %792 = vmatprep.subr.mxu0 0.0
    %793 = vmatpush1.msra.mxu0 0.0
    %794 = vmatprep.subr.mxu0 0.0
    %795 = vmatpush1.msra.mxu0 0.0
    %796 = vmatprep.subr.mxu0 0.0
    %797 = vmatpush1.msra.mxu0 0.0
    %798 = vmatprep.subr.mxu0 0.0
    %799 = vmatpush1.msra.mxu0 0.0
    %800 = vmatprep.subr.mxu0 0.0
    %801 = vmatpush1.msra.mxu0 0.0
    %802 = vmatprep.subr.mxu0 0.0
    %803 = vmatpush1.msra.mxu0 0.0
    %804 = vmatprep.subr.mxu0 0.0
    %805 = vmatpush1.msra.mxu0 0.0
    %806 = vmatprep.subr.mxu0 0.0
    %807 = vmatpush1.msra.mxu0 0.0
    %808 = vmatprep.subr.mxu0 0.0
    %809 = vmatpush1.msra.mxu0 0.0
    %810 = vmatprep.subr.mxu0 0.0
    %811 = vmatpush1.msra.mxu0 0.0
    %812 = vmatprep.subr.mxu0 0.0
    %813 = vmatpush1.msra.mxu0 0.0
    %814 = vmatprep.subr.mxu0 0.0
    %815 = vmatpush1.msra.mxu0 0.0
    %816 = vmatprep.subr.mxu0 0.0
    %817 = vmatpush1.msra.mxu0 0.0
    %818 = vmatprep.subr.mxu0 0.0
    %819 = vmatpush1.msra.mxu0 0.0
    %820 = vmatprep.subr.mxu0 0.0
    %821 = vmatpush1.msra.mxu0 0.0
    %822 = vmatprep.subr.mxu0 0.0
    %823 = vmatpush1.msra.mxu0 0.0
    %824 = vmatprep.subr.mxu0 0.0
    %825 = vmatpush1.msra.mxu0 0.0
    %826 = vmatprep.subr.mxu0 0.0
    %827 = vmatpush1.msra.mxu0 0.0
    %828 = vmatprep.subr.mxu0 0.0
    %829 = vmatpush1.msra.mxu0 0.0
    %830 = vmatprep.subr.mxu0 0.0
    %831 = vmatpush1.msra.mxu0 0.0
    %832 = vmatprep.subr.mxu0 0.0
    %833 = vmatpush1.msra.mxu0 0.0
    %834 = vmatprep.subr.mxu0 0.0
    %835 = vmatpush1.msra.mxu0 0.0
    %836 = vmatprep.subr.mxu0 0.0
    %837 = vmatpush1.msra.mxu0 0.0
    %838 = vmatprep.subr.mxu0 0.0
    %839 = vmatpush1.msra.mxu0 0.0
    %840 = vmatprep.subr.mxu0 0.0
    %841 = vmatpush1.msra.mxu0 0.0
    %842 = vmatprep.mubr.f32.mxu0 0.0
    %843 = vmatmul.mubr.f32.gmra.mrb[0].mxu0 %v776
    %v844 = vpop.f32.mrb[0].mxu0
    %v845 = vadd.f32 0.0, %v844
    %v846 = vpop.f32.mrb[0].mxu0
    %847 = vdwg.mxu0
    %v848 = vadd.f32 %v772, %v845
    %v849 = vtanh.pop %v848
    %v850 = vmul.f32 %v849, %v58
    %v851 = vadd.f32 %v850, %v65
    %v852 = vmul.f32 %v851, %v764
    %854 = vrot.lane.b32.xlu0 %v851, 64
    %v855 = vpop.permute.xlu0 %854
    %v857 = vmul.f32 %v851, %v855
    %859 = vrot.lane.b32.xlu0 %v857, 32
    %v860 = vpop.permute.xlu0 %859
    %v862 = vadd.f32 %v852, %v860
    %v863 = vtanh.pop %v862
    %865 = vrot.lane.b32.xlu0 %v863, 64
    %v866 = vpop.permute.xlu0 %865
    %v868 = vmul.f32 %v851, %v866
    %870 = vrot.lane.b32.xlu0 %v868, 32
    %v871 = vpop.permute.xlu0 %870
    %873 = vst.msk [vmem:[#allocation8] sm:$0xff] %vm84, %v871
    %875 = vrot.lane.b32.xlu0 %v862, 96
    %v876 = vpop.permute.xlu0 %875
    %878 = vst.msk [vmem:[#allocation2] sm:$0xff] %vm84, %v876
    // Predicated region
    $region30: #{tpu_custom_call.1} parent=1 // pred_check
      _
    $region31: #{tpu_custom_call.1} parent=1 // pred_check_branch
      %880 = sbr.rel (0) target = $region33
    $region32: #{tpu_custom_call.1} parent=1 // pred_region
      %s882 = ssub.s32 128, 128
      %883 = vsyncadd [#allocation5], %s882
      %s885 = sshll.u32 [#allocation8], 4
      %s886 = int_to_ptr.vmem [resolvable:$true] %s885
      %888 = dma.vmem_to_hbm [thread:$0]  %s886, 128, %s4, [#allocation5]
    $region33: #{tpu_custom_call.1} parent=1 // pred_fallthru
      _
    // Predicated region
    $region34: #{tpu_custom_call.1} parent=1 // pred_check
      _
    $region35: #{tpu_custom_call.1} parent=1 // pred_check_branch
      %890 = sbr.rel (0) target = $region37
    $region36: #{tpu_custom_call.1} parent=1 // pred_region
      %891 = dma.done [#allocation5], 128
    $region37: #{tpu_custom_call.1} parent=1 // pred_fallthru
      _
    %892 = vsyncpa [#allocation4], 1
    %893 = vsyncpa [#allocation7], 1
    %894 = vsyncpa [#allocation5], 1

</llo_original>
